<compile_context>
chip_gen: v7x
topology: tpu7x:2x2x1
jax: 0.10.0
libtpu: 0.0.40
codegen_flags: <defaults>
</compile_context>

<pallas_src>
import functools

import jax
import jax.numpy as jnp
from jax.experimental import pallas as pl
from jax.experimental.pallas import tpu as pltpu


def _round_up(x: int, m: int) -> int:
    return ((x + m - 1) // m) * m


def _consistency_kernel(s_ref, t_ref, out_ref, acc_ref, *, scale, block_rows, lanes):
    i = pl.program_id(1)  # inner (reduction) axis

    @pl.when(i == 0)
    def _():
        acc_ref[...] = jnp.zeros_like(acc_ref)

    # sigmoid(a) - sigmoid(b) = 0.5 * (tanh(a/2) - tanh(b/2)); 0.25 folded into `scale`.
    s = jnp.tanh(0.5 * s_ref[...].astype(jnp.float32))
    t = jnp.tanh(0.5 * t_ref[...].astype(jnp.float32))
    d = s - t
    sq = d * d
    # Sublane-group reduction (pure VPU adds, layout-preserving reshape) into the
    # (8, lanes) VMEM accumulator; no cross-lane XLU work per step.
    acc_ref[...] += jnp.sum(sq.reshape(block_rows // 8, 8, lanes), axis=0)

    @pl.when(i == pl.num_programs(1) - 1)
    def _():
        partial = jnp.sum(acc_ref[...]) * jnp.float32(scale)
        out_ref[...] = jnp.full_like(out_ref, partial)


def consistency_loss(student_pred: jax.Array, teacher_pred: jax.Array,
                     *, lanes: int = 512, max_block_rows: int = 512,
                     num_splits: int = 2) -> jax.Array:
    """Pallas implementation of ConsistencyLoss.forward (alpha unused in forward)."""
    assert student_pred.shape == teacher_pred.shape
    n_elems = student_pred.size

    # Flatten fully -> lane-dense 2-D slab (rows, lanes), zero-padded.
    s_flat = student_pred.reshape(-1)
    t_flat = teacher_pred.reshape(-1)

    rows_raw = pl.cdiv(n_elems, lanes)
    block_rows = min(max_block_rows, _round_up(rows_raw, 8))
    total_rows = _round_up(rows_raw, num_splits * block_rows)
    total = total_rows * lanes

    pad = total - n_elems
    if pad:
        s_flat = jnp.pad(s_flat, (0, pad))
        t_flat = jnp.pad(t_flat, (0, pad))
    s2 = s_flat.reshape(total_rows, lanes)
    t2 = t_flat.reshape(total_rows, lanes)

    steps = total_rows // (num_splits * block_rows)
    grid = (num_splits, steps)

    # 0.25 from the tanh identity folded into the mean normalization.
    scale = 0.25 / float(n_elems)
    kernel = functools.partial(_consistency_kernel, scale=scale,
                               block_rows=block_rows, lanes=lanes)

    partials = pl.pallas_call(
        kernel,
        out_shape=jax.ShapeDtypeStruct((num_splits, 8, 128), jnp.float32),
        grid_spec=pltpu.PrefetchScalarGridSpec(
            num_scalar_prefetch=0,
            grid=grid,
            in_specs=[
                pl.BlockSpec((block_rows, lanes), lambda p, i: (p * steps + i, 0)),
                pl.BlockSpec((block_rows, lanes), lambda p, i: (p * steps + i, 0)),
            ],
            out_specs=pl.BlockSpec((1, 8, 128), lambda p, i: (p, 0, 0)),
            scratch_shapes=[pltpu.VMEM((8, lanes), jnp.float32)],
        ),
        compiler_params=pltpu.CompilerParams(
            dimension_semantics=("parallel", "arbitrary"),
        ),
    )(s2, t2)
    # Each split's block is filled with its (already scaled) partial sum.
    return jnp.sum(partials[:, 0, 0])


def _reference(student_pred, teacher_pred):
    s = jax.nn.sigmoid(student_pred.astype(jnp.float32))
    t = jax.nn.sigmoid(teacher_pred.astype(jnp.float32))
    return jnp.mean((s - t) ** 2)


if __name__ == "__main__":
    key = jax.random.PRNGKey(0)
    k1, k2 = jax.random.split(key)
    # Small NCHW logits, as a segmentation-style prediction would be.
    shape = (2, 4, 16, 16)
    student = jax.random.normal(k1, shape, dtype=jnp.float32)
    teacher = jax.random.normal(k2, shape, dtype=jnp.float32)

    loss = consistency_loss(student, teacher)
    loss = jax.block_until_ready(loss)

    ref = _reference(student, teacher)
    assert jnp.allclose(loss, ref, atol=1e-6, rtol=1e-5), (loss, ref)
    print("KERNEL_OK")
</pallas_src>

<mosaic_0001>
module attributes {stable_mosaic.version = 11 : i64} {
  func.func @_consistency_kernel(%arg0: i32, %arg1: i32, %arg2: memref<8x512xf32, #tpu.memory_space<vmem>>, %arg3: memref<8x512xf32, #tpu.memory_space<vmem>>, %arg4: memref<1x8x128xf32, #tpu.memory_space<vmem>>, %arg5: memref<8x512xf32, #tpu.memory_space<vmem>>) attributes {dimension_semantics = [#tpu.dimension_semantics<parallel>, #tpu.dimension_semantics<arbitrary>], iteration_bounds = array<i64: 2, 1>, scalar_prefetch = 0 : i64, scratch_operands = 1 : i64, tpu.core_type = #tpu.core_type<tc>, window_params = [{transform_indices = @transform_0, window_bounds = array<i64: 8, 512>}, {transform_indices = @transform_1, window_bounds = array<i64: 8, 512>}, {transform_indices = @transform_2, window_bounds = array<i64: 1, 8, 128>}]} {
    %c0_i32 = arith.constant 0 : i32
    %0 = arith.cmpi eq, %arg1, %c0_i32 : i32
    %1 = arith.extui %0 : i1 to i32
    %c0_i32_0 = arith.constant 0 : i32
    %2 = arith.cmpi ne, %1, %c0_i32_0 : i32
    scf.if %2 {
      %cst_12 = arith.constant 0.000000e+00 : f32
      %21 = vector.broadcast %cst_12 : f32 to vector<8x512xf32>
      %c0_13 = arith.constant 0 : index
      %c0_14 = arith.constant 0 : index
      %22 = vector.load %arg5[%c0_13, %c0_14] : memref<8x512xf32, #tpu.memory_space<vmem>>, vector<8x512xf32>
      tpu.vector_store %arg5[%c0_13, %c0_14], %21 {strides = array<i32>} : memref<8x512xf32, #tpu.memory_space<vmem>>, vector<8x512xf32>,
    } else {
    }
    %c0 = arith.constant 0 : index
    %c0_1 = arith.constant 0 : index
    %3 = vector.load %arg2[%c0, %c0_1] : memref<8x512xf32, #tpu.memory_space<vmem>>, vector<8x512xf32>
    %cst = arith.constant 5.000000e-01 : f32
    %4 = vector.broadcast %cst : f32 to vector<8x512xf32>
    %5 = arith.mulf %4, %3 : vector<8x512xf32>
    %6 = math.tanh %5 : vector<8x512xf32>
    %c0_2 = arith.constant 0 : index
    %c0_3 = arith.constant 0 : index
    %7 = vector.load %arg3[%c0_2, %c0_3] : memref<8x512xf32, #tpu.memory_space<vmem>>, vector<8x512xf32>
    %cst_4 = arith.constant 5.000000e-01 : f32
    %8 = vector.broadcast %cst_4 : f32 to vector<8x512xf32>
    %9 = arith.mulf %8, %7 : vector<8x512xf32>
    %10 = math.tanh %9 : vector<8x512xf32>
    %11 = arith.subf %6, %10 : vector<8x512xf32>
    %12 = arith.mulf %11, %11 : vector<8x512xf32>
    %c0_5 = arith.constant 0 : index
    %c0_6 = arith.constant 0 : index
    %13 = vector.load %arg5[%c0_5, %c0_6] : memref<8x512xf32, #tpu.memory_space<vmem>>, vector<8x512xf32>
    %14 = vector.shape_cast %12 : vector<8x512xf32> to vector<1x8x512xf32>
    %cst_7 = arith.constant dense<0.000000e+00> : vector<8x512xf32>
    %15 = vector.multi_reduction <add>, %14, %cst_7 [0] : vector<1x8x512xf32> to vector<8x512xf32>
    %16 = arith.addf %13, %15 : vector<8x512xf32>
    %c0_8 = arith.constant 0 : index
    %c0_9 = arith.constant 0 : index
    %17 = vector.load %arg5[%c0_8, %c0_9] : memref<8x512xf32, #tpu.memory_space<vmem>>, vector<8x512xf32>
    tpu.vector_store %arg5[%c0_8, %c0_9], %16 {strides = array<i32>} : memref<8x512xf32, #tpu.memory_space<vmem>>, vector<8x512xf32>,
    %c0_i32_10 = arith.constant 0 : i32
    %18 = arith.cmpi eq, %arg1, %c0_i32_10 : i32
    %19 = arith.extui %18 : i1 to i32
    %c0_i32_11 = arith.constant 0 : i32
    %20 = arith.cmpi ne, %19, %c0_i32_11 : i32
    scf.if %20 {
      %c0_12 = arith.constant 0 : index
      %c0_13 = arith.constant 0 : index
      %21 = vector.load %arg5[%c0_12, %c0_13] : memref<8x512xf32, #tpu.memory_space<vmem>>, vector<8x512xf32>
      %22 = vector.shape_cast %21 : vector<8x512xf32> to vector<1x8x512xf32>
      %cst_14 = arith.constant dense<0.000000e+00> : vector<1xf32>
      %23 = vector.multi_reduction <add>, %22, %cst_14 [1, 2] : vector<1x8x512xf32> to vector<1xf32>
      %24 = vector.shape_cast %23 : vector<1xf32> to vector<1x1x1xf32>
      %25 = vector.extract %24[0, 0, 0] : f32 from vector<1x1x1xf32>
      %cst_15 = arith.constant 1.22070313E-4 : f32
      %26 = arith.mulf %25, %cst_15 : f32
      %27 = vector.broadcast %26 : f32 to vector<1x8x128xf32>
      %c0_16 = arith.constant 0 : index
      %c0_17 = arith.constant 0 : index
      %c0_18 = arith.constant 0 : index
      %28 = vector.load %arg4[%c0_16, %c0_17, %c0_18] : memref<1x8x128xf32, #tpu.memory_space<vmem>>, vector<1x8x128xf32>
      tpu.vector_store %arg4[%c0_16, %c0_17, %c0_18], %27 {strides = array<i32>} : memref<1x8x128xf32, #tpu.memory_space<vmem>>, vector<1x8x128xf32>,
    } else {
    }
    return
  }
  func.func @transform_0(%arg0: i32, %arg1: i32) -> (i32, i32) {
    %c1_i32 = arith.constant 1 : i32
    %0 = arith.muli %arg0, %c1_i32 : i32
    %1 = arith.addi %0, %arg1 : i32
    %c0_i32 = arith.constant 0 : i32
    %c0_i32_0 = arith.constant 0 : i32
    return %1, %c0_i32 : i32, i32
  }
  func.func @transform_1(%arg0: i32, %arg1: i32) -> (i32, i32) {
    %c1_i32 = arith.constant 1 : i32
    %0 = arith.muli %arg0, %c1_i32 : i32
    %1 = arith.addi %0, %arg1 : i32
    %c0_i32 = arith.constant 0 : i32
    %c0_i32_0 = arith.constant 0 : i32
    return %1, %c0_i32 : i32, i32
  }
  func.func @transform_2(%arg0: i32, %arg1: i32) -> (i32, i32, i32) {
    %c0_i32 = arith.constant 0 : i32
    %c0_i32_0 = arith.constant 0 : i32
    %c0_i32_1 = arith.constant 0 : i32
    return %arg0, %c0_i32, %c0_i32_0 : i32, i32, i32
  }
}

</mosaic_0001>

<llo_original>
// kernel: tpu_custom_call.1
$region0: #{tpu_custom_call.1}
  #allocation0 [shape = 'u32[]', space=smem, size = 0x4, offset = 0x4, fixed_abs, tag = 'smem constant byte address 0x4 - core index']
  #allocation1 [shape = 'u32[144,128]{1,0:T(1,128)}', space=vmem, size = 0x12000, scoped, tag = 'internal scratch']
  #allocation2 [shape = 'f32[8,512]{1,0:T(8,128)}', space=vmem, size = 0x4000, scoped, tag = 'scratch operand']
  %s0 = inlined_call_operand.hbm [shape: f32[16,512], index: 0, kind: input, shape index: {}]
  %s1 = inlined_call_operand.hbm [shape: f32[16,512], index: 1, kind: input, shape index: {}]
  %s2 = inlined_call_operand.hbm [shape: f32[2,8,128], index: 2, kind: output, shape index: {}]
  %s3 = sld [smem:[#allocation0]]
  $region57: #{tpu_custom_call.1} parent=0
    _
  %s5 = ssub.s32 1, %s3
  %s6 = scalar_select 0, %s5, %s3
  $region1: #{tpu_custom_call.1} parent=0
    #allocation3 [shape = 'u8[32768]{0}', space=vmem, size = 0x8000, scoped, tag = 'input window, operand 0']
    #allocation4 [shape = 's32[2]{0}', space=sflag, size = 0x8, scoped, tag = 'scoped memory for tpu_custom_call.1']
    #allocation5 [shape = 's32[2]{0}', space=sflag, size = 0x8, scoped, tag = 'scoped memory for tpu_custom_call.1']
    #allocation6 [shape = 'u8[32768]{0}', space=vmem, size = 0x8000, scoped, tag = 'input window, operand 1']
    #allocation7 [shape = 's32[2]{0}', space=sflag, size = 0x8, scoped, tag = 'scoped memory for tpu_custom_call.1']
    #allocation8 [shape = 'u8[8192]{0}', space=vmem, size = 0x2000, scoped, tag = 'output window, operand 0']
    %7 = vsyncpa [#allocation4], 0
    %s8 = scalar_lea.sflag [#allocation4], 1
    %9 = vsyncpa %s8, 0
    %10 = vsyncpa [#allocation7], 0
    %s11 = scalar_lea.sflag [#allocation7], 1
    %12 = vsyncpa %s11, 0
    %13 = vsyncpa [#allocation5], 0
    %s14 = scalar_lea.sflag [#allocation5], 1
    %15 = vsyncpa %s14, 0
    loop: start=0, step=1, limit=4
    $region2: #{tpu_custom_call.1} parent=1 // loop_pre_header
      _
    $region3: #{tpu_custom_call.1} parent=1 // loop_header
      %s17 = sphi 0, %s21
      %p18 = scmp.ge.s32.totalorder %s17, 4
      %s24 = sphi 0, %s36
      %s25 = sphi 0, %s32
      %s26 = sphi 0, %s24
      %s27 = sphi 0, %s25
      %s28 = sphi 0, %s26
      %s29 = sphi 0, %s27
      %s41 = sphi 0, %s43
      %s44 = sphi 0, %s41
      %s45 = sphi 0, %s44
      %s61 = sphi 0, %s45
      %s69 = sphi 0, %s71
      %s72 = sphi 0, %s69
      %s73 = sphi 0, %s72
      %s89 = sphi 0, %s73
      %s95 = sphi 0, %s97
      %s98 = sphi 0, %s95
      %s99 = sphi 0, %s98
      %s115 = sphi 0, %s99
    $region4: #{tpu_custom_call.1} parent=1 // loop_header_branch
      %20 = sbr.rel (%p18) target = $region8
    $region5: #{tpu_custom_call.1} parent=1 // loop_body
      %s22 = ssub.s32 %s17, 1
      %s23 = ssub.s32 %s17, 2
      %s30 = sadd.s32 1, %s25
      %p31 = scmp.ge.s32.totalorder %s30, 1
      %s32 = scalar_select %p31, 0, %s30
      %s33 = sadd.s32 1, %s24
      %s34 = scalar_select %p31, %s33, %s24
      %p35 = scmp.ge.s32.totalorder %s34, 2
      %s36 = scalar_select %p35, 0, %s34
      %s37 = sadd.s32 %s24, %s25
      %s38 = sadd.s32 %s36, %s32
      %s39 = ssub.s32 %s37, %s38
      %p40 = scmp.eq.s32.totalorder %s39, 0
      %s42 = sadd.s32 %s41, 1
      %s43 = scalar_select %p40, %s41, %s42
      %p46 = pneg %p40
      %p47 = scmp.eq.s32.totalorder %s17, 1
      %p48 = por %p46, %p47
      %p49 = scmp.ne.s32.totalorder %s41, %s44
      %p50 = scmp.eq.s32.totalorder %s17, 0
      %p51 = por %p49, %p50
      %p52 = scmp.ne.s32.totalorder %s41, %s44
      %p53 = scmp.eq.s32.totalorder %s22, 1
      %p54 = por %p52, %p53
      %p55 = scmp.ne.s32.totalorder %s44, %s45
      %p56 = scmp.eq.s32.totalorder %s22, 0
      %p57 = por %p55, %p56
      %p58 = scmp.ne.s32.totalorder %s44, %s45
      %p59 = scmp.eq.s32.totalorder %s23, 1
      %p60 = por %p58, %p59
      %p62 = scmp.ne.s32.totalorder %s45, %s61
      %p63 = scmp.eq.s32.totalorder %s23, 0
      %p64 = por %p62, %p63
      %s65 = sadd.s32 %s24, %s25
      %s66 = sadd.s32 %s36, %s32
      %s67 = ssub.s32 %s65, %s66
      %p68 = scmp.eq.s32.totalorder %s67, 0
      %s70 = sadd.s32 %s69, 1
      %s71 = scalar_select %p68, %s69, %s70
      %p74 = pneg %p68
      %p75 = scmp.eq.s32.totalorder %s17, 1
      %p76 = por %p74, %p75
      %p77 = scmp.ne.s32.totalorder %s69, %s72
      %p78 = scmp.eq.s32.totalorder %s17, 0
      %p79 = por %p77, %p78
      %p80 = scmp.ne.s32.totalorder %s69, %s72
      %p81 = scmp.eq.s32.totalorder %s22, 1
      %p82 = por %p80, %p81
      %p83 = scmp.ne.s32.totalorder %s72, %s73
      %p84 = scmp.eq.s32.totalorder %s22, 0
      %p85 = por %p83, %p84
      %p86 = scmp.ne.s32.totalorder %s72, %s73
      %p87 = scmp.eq.s32.totalorder %s23, 1
      %p88 = por %p86, %p87
      %p90 = scmp.ne.s32.totalorder %s73, %s89
      %p91 = scmp.eq.s32.totalorder %s23, 0
      %p92 = por %p90, %p91
      %s93 = ssub.s32 %s24, %s36
      %p94 = scmp.eq.s32.totalorder %s93, 0
      %s96 = sadd.s32 %s95, 1
      %s97 = scalar_select %p94, %s95, %s96
      %p100 = pneg %p94
      %p101 = scmp.eq.s32.totalorder %s17, 1
      %p102 = por %p100, %p101
      %p103 = scmp.ne.s32.totalorder %s95, %s98
      %p104 = scmp.eq.s32.totalorder %s17, 0
      %p105 = por %p103, %p104
      %p106 = scmp.ne.s32.totalorder %s95, %s98
      %p107 = scmp.eq.s32.totalorder %s22, 1
      %p108 = por %p106, %p107
      %p109 = scmp.ne.s32.totalorder %s98, %s99
      %p110 = scmp.eq.s32.totalorder %s22, 0
      %p111 = por %p109, %p110
      %p112 = scmp.ne.s32.totalorder %s98, %s99
      %p113 = scmp.eq.s32.totalorder %s23, 1
      %p114 = por %p112, %p113
      %p116 = scmp.ne.s32.totalorder %s99, %s115
      %p117 = scmp.eq.s32.totalorder %s23, 0
      %p118 = por %p116, %p117
      %p119 = scmp.le.s32.totalorder 1, %s17
      %p120 = scmp.lt.s32.totalorder %s17, 3
      %p121 = pnand %p119, %p120
      %p122 = pneg %p121
      // Predicated region
      $region9: #{tpu_custom_call.1} parent=5 // pred_check
        _
      $region10: #{tpu_custom_call.1} parent=5 // pred_check_branch
        %124 = sbr.rel (%p121) target = $region12
      $region11: #{tpu_custom_call.1} parent=5 // pred_region
        %s125 = ssub.s32 %s17, 1
      $region12: #{tpu_custom_call.1} parent=5 // pred_fallthru
        _
      %p126 = scmp.lt.s32.totalorder %s17, 2
      // Predicated region
      $region13: #{tpu_custom_call.1} parent=5 // pred_check
        %p127 = pneg %p126
      $region14: #{tpu_custom_call.1} parent=5 // pred_check_branch
        %129 = sbr.rel (%p127) target = $region16
      $region15: #{tpu_custom_call.1} parent=5 // pred_region
        // Predicated region
        $region17: #{tpu_custom_call.1} parent=15 // pred_check
          %p130 = pneg %p51
        $region18: #{tpu_custom_call.1} parent=15 // pred_check_branch
          %132 = sbr.rel (%p130) target = $region20
        $region19: #{tpu_custom_call.1} parent=15 // pred_region
          %s133 = sand.u32 %s41, 1
          %s134 = scalar_lea.sflag [#allocation4], %s133
          %s135 = sand.u32 %s41, 1
          %s136 = smul.addr %s135, 32
          %s137 = scalar_lea.vmem [#allocation3], %s136
          %s138 = sadd.s32 %s24, %s25
          %s140 = ssub.s32 512, 512
          %141 = vsyncadd %s134, %s140
          %s142 = smul.addr %s138, 4
          %s143 = smul.addr %s142, 128
          %s144 = scalar_lea.hbm %s0, %s143
          %s146 = sshll.u32 %s137, 4
          %s147 = int_to_ptr.vmem [resolvable:$true] %s146
          %149 = dma.hbm_to_vmem [thread:$0]  %s144, 512, %s147, %s134
        $region20: #{tpu_custom_call.1} parent=15 // pred_fallthru
          _
        // Predicated region
        $region21: #{tpu_custom_call.1} parent=15 // pred_check
          %p150 = pneg %p79
        $region22: #{tpu_custom_call.1} parent=15 // pred_check_branch
          %152 = sbr.rel (%p150) target = $region24
        $region23: #{tpu_custom_call.1} parent=15 // pred_region
          %s153 = sand.u32 %s69, 1
          %s154 = scalar_lea.sflag [#allocation7], %s153
          %s155 = sand.u32 %s69, 1
          %s156 = smul.addr %s155, 32
          %s157 = scalar_lea.vmem [#allocation6], %s156
          %s158 = sadd.s32 %s24, %s25
          %s160 = ssub.s32 512, 512
          %161 = vsyncadd %s154, %s160
          %s162 = smul.addr %s158, 4
          %s163 = smul.addr %s162, 128
          %s164 = scalar_lea.hbm %s1, %s163
          %s166 = sshll.u32 %s157, 4
          %s167 = int_to_ptr.vmem [resolvable:$true] %s166
          %169 = dma.hbm_to_vmem [thread:$0]  %s164, 512, %s167, %s154
        $region24: #{tpu_custom_call.1} parent=15 // pred_fallthru
          _
      $region16: #{tpu_custom_call.1} parent=5 // pred_fallthru
        _
      %p170 = scmp.le.s32.totalorder 1, %s17
      %p171 = scmp.lt.s32.totalorder %s17, 3
      %p172 = pnand %p170, %p171
      %p173 = pneg %p172
      // Predicated region
      $region25: #{tpu_custom_call.1} parent=5 // pred_check
        _
      $region26: #{tpu_custom_call.1} parent=5 // pred_check_branch
        %175 = sbr.rel (%p172) target = $region28
      $region27: #{tpu_custom_call.1} parent=5 // pred_region
        %s176 = ssub.s32 %s17, 1
        %s177 = sand.u32 %s44, 1
        %s178 = scalar_lea.sflag [#allocation4], %s177
        %s179 = sand.u32 %s44, 1
        %s180 = smul.addr %s179, 32
        %s181 = scalar_lea.vmem [#allocation3], %s180
        // Predicated region
        $region29: #{tpu_custom_call.1} parent=27 // pred_check
          %p182 = pneg %p57
        $region30: #{tpu_custom_call.1} parent=27 // pred_check_branch
          %184 = sbr.rel (%p182) target = $region32
        $region31: #{tpu_custom_call.1} parent=27 // pred_region
          %185 = dma.done %s178, 512
        $region32: #{tpu_custom_call.1} parent=27 // pred_fallthru
          _
        %s186 = sand.u32 %s72, 1
        %s187 = scalar_lea.sflag [#allocation7], %s186
        %s188 = sand.u32 %s72, 1
        %s189 = smul.addr %s188, 32
        %s190 = scalar_lea.vmem [#allocation6], %s189
        // Predicated region
        $region33: #{tpu_custom_call.1} parent=27 // pred_check
          %p191 = pneg %p85
        $region34: #{tpu_custom_call.1} parent=27 // pred_check_branch
          %193 = sbr.rel (%p191) target = $region36
        $region35: #{tpu_custom_call.1} parent=27 // pred_region
          %194 = dma.done %s187, 512
        $region36: #{tpu_custom_call.1} parent=27 // pred_fallthru
          _
        %s195 = sand.u32 %s44, 1
        %s196 = scalar_lea.sflag [#allocation4], %s195
        %s197 = sand.u32 %s44, 1
        %s198 = smul.addr %s197, 32
        %s199 = scalar_lea.vmem [#allocation3], %s198
        %p200 = pneg %p57
        %p201 = pneg %p54
        %s202 = sand.u32 %s72, 1
        %s203 = scalar_lea.sflag [#allocation7], %s202
        %s204 = sand.u32 %s72, 1
        %s205 = smul.addr %s204, 32
        %s206 = scalar_lea.vmem [#allocation6], %s205
        %p207 = pneg %p85
        %p208 = pneg %p82
        %p209 = pneg %p111
        %p210 = pneg %p108
        %s211 = sand.u32 %s98, 1
        %s212 = scalar_lea.sflag [#allocation5], %s211
        %s213 = sand.u32 %s98, 1
        %s214 = smul.addr %s213, 8
        %s215 = scalar_lea.vmem [#allocation8], %s214
        %s216 = sadd.s32 %s26, %s27
        %s217 = sadd.s32 %s26, %s27
        %p218 = scmp.eq.s32.totalorder %s27, 0
        // Predicated region
        $region37: #{tpu_custom_call.1} parent=27 // pred_check
          %p219 = pneg %p218
        $region38: #{tpu_custom_call.1} parent=27 // pred_check_branch
          %221 = sbr.rel (%p219) target = $region40
        $region39: #{tpu_custom_call.1} parent=27 // pred_region
          %222 = vst [vmem:[#allocation2] sm:$0xff] 0.0
          %223 = vst [vmem:[#allocation2 + $0x8] sm:$0xff] 0.0
          %224 = vst [vmem:[#allocation2 + $0x10] sm:$0xff] 0.0
          %225 = vst [vmem:[#allocation2 + $0x18] sm:$0xff] 0.0
        $region40: #{tpu_custom_call.1} parent=27 // pred_fallthru
          _
        %v226 = vld [vmem:[%s181] sm:$0xff]
        %v227 = vld [vmem:[%s181 + $0x8] sm:$0xff]
        %v228 = vld [vmem:[%s181 + $0x10] sm:$0xff]
        %v229 = vld [vmem:[%s181 + $0x18] sm:$0xff]
        %v230 = vmul.f32 %v226, 0.5
        %v231 = vmul.f32 %v227, 0.5
        %v232 = vmul.f32 %v228, 0.5
        %v233 = vmul.f32 %v229, 0.5
        %v234 = vtanh.pop %v230
        %v235 = vtanh.pop %v231
        %v236 = vtanh.pop %v232
        %v237 = vtanh.pop %v233
        %v238 = vld [vmem:[%s190] sm:$0xff]
        %v239 = vld [vmem:[%s190 + $0x8] sm:$0xff]
        %v240 = vld [vmem:[%s190 + $0x10] sm:$0xff]
        %v241 = vld [vmem:[%s190 + $0x18] sm:$0xff]
        %v242 = vmul.f32 %v238, 0.5
        %v243 = vmul.f32 %v239, 0.5
        %v244 = vmul.f32 %v240, 0.5
        %v245 = vmul.f32 %v241, 0.5
        %v246 = vtanh.pop %v242
        %v247 = vtanh.pop %v243
        %v248 = vtanh.pop %v244
        %v249 = vtanh.pop %v245
        %v250 = vsub.f32 %v234, %v246
        %v251 = vsub.f32 %v235, %v247
        %v252 = vsub.f32 %v236, %v248
        %v253 = vsub.f32 %v237, %v249
        %v254 = vmul.f32 %v250, %v250
        %v255 = vmul.f32 %v251, %v251
        %v256 = vmul.f32 %v252, %v252
        %v257 = vmul.f32 %v253, %v253
        %v258 = vld [vmem:[#allocation2] sm:$0xff]
        %v259 = vld [vmem:[#allocation2 + $0x8] sm:$0xff]
        %v260 = vld [vmem:[#allocation2 + $0x10] sm:$0xff]
        %v261 = vld [vmem:[#allocation2 + $0x18] sm:$0xff]
        %v262 = vadd.f32 %v254, 0.0
        %v263 = vadd.f32 %v255, 0.0
        %v264 = vadd.f32 %v256, 0.0
        %v265 = vadd.f32 %v257, 0.0
        %v266 = vadd.f32 %v258, %v262
        %v267 = vadd.f32 %v259, %v263
        %v268 = vadd.f32 %v260, %v264
        %v269 = vadd.f32 %v261, %v265
        %270 = vst [vmem:[#allocation2] sm:$0xff] %v266
        %271 = vst [vmem:[#allocation2 + $0x8] sm:$0xff] %v267
        %272 = vst [vmem:[#allocation2 + $0x10] sm:$0xff] %v268
        %273 = vst [vmem:[#allocation2 + $0x18] sm:$0xff] %v269
        // Predicated region
        $region41: #{tpu_custom_call.1} parent=27 // pred_check
          %p274 = pneg %p218
        $region42: #{tpu_custom_call.1} parent=27 // pred_check_branch
          %276 = sbr.rel (%p274) target = $region44
        $region43: #{tpu_custom_call.1} parent=27 // pred_region
          %v277 = vld [vmem:[#allocation2] sm:$0xff]
          %v278 = vld [vmem:[#allocation2 + $0x8] sm:$0xff]
          %v279 = vld [vmem:[#allocation2 + $0x10] sm:$0xff]
          %v280 = vld [vmem:[#allocation2 + $0x18] sm:$0xff]
          %v281 = vadd.f32 %v277, %v278
          %v282 = vadd.f32 %v281, %v279
          %v283 = vadd.f32 %v282, %v280
          %284 = vadd.xlane.f32.xlu0 %v283
          %v285 = vpop.xlane.xlu0 %284
          %v286 = vrot.slane %v285, 4
          %v287 = vadd.f32 %v285, %v286
          %v288 = vrot.slane %v287, 2
          %v289 = vadd.f32 %v287, %v288
          %v290 = vrot.slane %v289, 1
          %v291 = vadd.f32 %v289, %v290
          %s292 = vtos %v291
          %s293 = smul.f32 %s292, 0.00012207031
          %v294 = vstv %s293
          %295 = vst [vmem:[%s215] sm:$0xff] %v294
        $region44: #{tpu_custom_call.1} parent=27 // pred_fallthru
          _
        %s296 = sand.u32 %s98, 1
        %s297 = scalar_lea.sflag [#allocation5], %s296
        %s298 = sand.u32 %s98, 1
        %s299 = smul.addr %s298, 8
        %s300 = scalar_lea.vmem [#allocation8], %s299
        // Predicated region
        $region45: #{tpu_custom_call.1} parent=27 // pred_check
          %p301 = pneg %p108
        $region46: #{tpu_custom_call.1} parent=27 // pred_check_branch
          %303 = sbr.rel (%p301) target = $region48
        $region47: #{tpu_custom_call.1} parent=27 // pred_region
          %s305 = ssub.s32 128, 128
          %306 = vsyncadd %s297, %s305
          %s307 = smul.addr %s26, 128
          %s308 = scalar_lea.hbm %s2, %s307
          %s310 = sshll.u32 %s300, 4
          %s311 = int_to_ptr.vmem [resolvable:$true] %s310
          %313 = dma.vmem_to_hbm [thread:$0]  %s311, 128, %s308, %s297
        $region48: #{tpu_custom_call.1} parent=27 // pred_fallthru
          _
      $region28: #{tpu_custom_call.1} parent=5 // pred_fallthru
        _
      %p314 = scmp.le.s32.totalorder 2, %s17
      // Predicated region
      $region49: #{tpu_custom_call.1} parent=5 // pred_check
        %p315 = pneg %p314
      $region50: #{tpu_custom_call.1} parent=5 // pred_check_branch
        %317 = sbr.rel (%p315) target = $region52
      $region51: #{tpu_custom_call.1} parent=5 // pred_region
        %s318 = ssub.s32 %s17, 2
        // Predicated region
        $region53: #{tpu_custom_call.1} parent=51 // pred_check
          %p319 = pneg %p114
        $region54: #{tpu_custom_call.1} parent=51 // pred_check_branch
          %321 = sbr.rel (%p319) target = $region56
        $region55: #{tpu_custom_call.1} parent=51 // pred_region
          %s322 = sand.u32 %s99, 1
          %s323 = scalar_lea.sflag [#allocation5], %s322
          %s324 = sand.u32 %s99, 1
          %s325 = smul.addr %s324, 8
          %s326 = scalar_lea.vmem [#allocation8], %s325
          %327 = dma.done %s323, 128
        $region56: #{tpu_custom_call.1} parent=51 // pred_fallthru
          _
      $region52: #{tpu_custom_call.1} parent=5 // pred_fallthru
        _
    $region6: #{tpu_custom_call.1} parent=1 // loop_footer
      %s21 = sadd.s32 1, %s17
    $region7: #{tpu_custom_call.1} parent=1 // loop_footer_branch
      %16 = sbr.rel target = $region3
    $region8: #{tpu_custom_call.1} parent=1 // loop_exit
      _
    %328 = vsyncpa [#allocation4], 1
    %s329 = scalar_lea.sflag [#allocation4], 1
    %330 = vsyncpa %s329, 1
    %331 = vsyncpa [#allocation7], 1
    %s332 = scalar_lea.sflag [#allocation7], 1
    %333 = vsyncpa %s332, 1
    %334 = vsyncpa [#allocation5], 1
    %s335 = scalar_lea.sflag [#allocation5], 1
    %336 = vsyncpa %s335, 1

</llo_original>
